<compile_context>
chip_gen: v7x
topology: tpu7x:2x2x1
jax: 0.10.0
libtpu: 0.0.40
codegen_flags: <defaults>
</compile_context>

<pallas_src>
import jax
import jax.numpy as jnp
from jax.experimental import pallas as pl
from jax.experimental.pallas import tpu as pltpu


def conv_bn_relu_kernel(p_ref, w_ref, b_ref, o_ref):
    # p_ref: (N, K, HW)     im2col patches, K = kH*kW*Cin
    # w_ref: (Cout, K)      conv weights with the BN scale folded in
    # b_ref: (Cout, 1)      folded bias: (conv_bias - mean) * scale + beta
    # o_ref: (N, Cout, HW)  channel-major output (lane dim = HW -> dense stores)
    n_batch = p_ref.shape[0]
    w = w_ref[...]
    b = b_ref[...]
    for n in range(n_batch):  # static, fully unrolled (N is tiny)
        # Single MXU matmul per batch element: (Cout, K) x (K, HW) -> (Cout, HW)
        y = jnp.dot(w, p_ref[n], preferred_element_type=jnp.float32)
        o_ref[n] = jnp.maximum(y + b, 0.0).astype(o_ref.dtype)  # +bias, ReLU


def conv_brunch_forward(x_nchw, w_oihw, conv_bias, gamma, beta,
                        running_mean, running_var, eps=1e-5):
    """ConvBrunch forward: Conv2d(pad=SAME) -> BN(eval) -> ReLU. NCHW in/out."""
    N, Cin, H, W = x_nchw.shape
    Cout, _, kH, kW = w_oihw.shape
    pad = (kH - 1) // 2
    HW = H * W
    K = kH * kW * Cin

    # Fold BN (eval mode) into a per-channel scale/bias; fold scale into weights.
    scale = gamma / jnp.sqrt(running_var + eps)                    # (Cout,)
    bias = (conv_bias - running_mean) * scale + beta               # (Cout,)

    # Glue (XLA side): zero-pad + im2col the input, flatten & scale the weights.
    x_pad = jnp.pad(x_nchw.astype(jnp.float32),
                    ((0, 0), (0, 0), (pad, pad), (pad, pad)))      # (N,Cin,H+2,W+2)
    taps = [x_pad[:, :, ky:ky + H, kx:kx + W]
            for ky in range(kH) for kx in range(kW)]               # 9 x (N,Cin,H,W)
    patches = jnp.stack(taps, axis=1).reshape(N, K, HW)            # (N, 36, HW)

    # w_flat[o, (ky*kW+kx)*Cin + ci] = w[o, ci, ky, kx] -- matches im2col K order.
    w_flat = jnp.transpose(w_oihw, (0, 2, 3, 1)).reshape(Cout, K)  # (Cout, 36)
    w_scaled = (w_flat * scale[:, None]).astype(jnp.float32)
    bias_col = bias.reshape(Cout, 1).astype(jnp.float32)

    out = pl.pallas_call(
        conv_bn_relu_kernel,
        out_shape=jax.ShapeDtypeStruct((N, Cout, HW), jnp.float32),
        # No grid: one invocation, whole (tiny) operands resident in VMEM.
        in_specs=[
            pl.BlockSpec(memory_space=pltpu.MemorySpace.VMEM),
            pl.BlockSpec(memory_space=pltpu.MemorySpace.VMEM),
            pl.BlockSpec(memory_space=pltpu.MemorySpace.VMEM),
        ],
        out_specs=pl.BlockSpec(memory_space=pltpu.MemorySpace.VMEM),
    )(patches, w_scaled, bias_col)

    # Already channel-major: (N, Cout, H*W) -> (N, Cout, H, W) is a free reshape.
    return out.reshape(N, Cout, H, W)


def reference_forward(x_nchw, w_oihw, conv_bias, gamma, beta,
                      running_mean, running_var, eps=1e-5):
    y = jax.lax.conv_general_dilated(
        x_nchw, w_oihw, window_strides=(1, 1), padding="SAME",
        dimension_numbers=("NCHW", "OIHW", "NCHW"))
    y = y + conv_bias[None, :, None, None]
    scale = gamma / jnp.sqrt(running_var + eps)
    y = (y - running_mean[None, :, None, None]) * scale[None, :, None, None] \
        + beta[None, :, None, None]
    return jnp.maximum(y, 0.0)


if __name__ == "__main__":
    # Small shapes consistent with ConvBrunch(in_planes=4, out_planes=8, kernel_size=3)
    N, Cin, H, W = 2, 4, 16, 16
    Cout, k = 8, 3

    key = jax.random.PRNGKey(0)
    kx, kw, kb, kg, kbeta, km, kv = jax.random.split(key, 7)

    x = jax.random.normal(kx, (N, Cin, H, W), dtype=jnp.float32)
    w = jax.random.normal(kw, (Cout, Cin, k, k), dtype=jnp.float32) * 0.1
    conv_bias = jax.random.normal(kb, (Cout,), dtype=jnp.float32) * 0.1
    gamma = 1.0 + 0.1 * jax.random.normal(kg, (Cout,), dtype=jnp.float32)
    beta = 0.1 * jax.random.normal(kbeta, (Cout,), dtype=jnp.float32)
    running_mean = 0.1 * jax.random.normal(km, (Cout,), dtype=jnp.float32)
    running_var = 1.0 + 0.1 * jax.random.uniform(kv, (Cout,), dtype=jnp.float32)

    out = conv_brunch_forward(x, w, conv_bias, gamma, beta,
                              running_mean, running_var)
    out = jax.block_until_ready(out)

    ref = reference_forward(x, w, conv_bias, gamma, beta,
                            running_mean, running_var)
    assert out.shape == (N, Cout, H, W)
    assert jnp.allclose(out, ref, atol=1e-4, rtol=1e-4), \
        float(jnp.max(jnp.abs(out - ref)))

    print("KERNEL_OK")
</pallas_src>

<mosaic_0001>
module attributes {stable_mosaic.version = 11 : i64} {
  func.func @conv_bn_relu_kernel(%arg0: memref<2x36x256xf32, #tpu.memory_space<vmem>>, %arg1: memref<8x36xf32, #tpu.memory_space<vmem>>, %arg2: memref<8x1xf32, #tpu.memory_space<vmem>>, %arg3: memref<2x8x256xf32, #tpu.memory_space<vmem>>) attributes {dimension_semantics = [], scalar_prefetch = 0 : i64, scratch_operands = 0 : i64, tpu.core_type = #tpu.core_type<tc>} {
    %c0 = arith.constant 0 : index
    %c0_0 = arith.constant 0 : index
    %0 = vector.load %arg1[%c0, %c0_0] : memref<8x36xf32, #tpu.memory_space<vmem>>, vector<8x36xf32>
    %c0_1 = arith.constant 0 : index
    %c0_2 = arith.constant 0 : index
    %1 = vector.load %arg2[%c0_1, %c0_2] : memref<8x1xf32, #tpu.memory_space<vmem>>, vector<8x1xf32>
    %c0_3 = arith.constant 0 : index
    %c0_4 = arith.constant 0 : index
    %c0_5 = arith.constant 0 : index
    %2 = vector.load %arg0[%c0_3, %c0_4, %c0_5] : memref<2x36x256xf32, #tpu.memory_space<vmem>>, vector<1x36x256xf32>
    %3 = vector.shape_cast %2 : vector<1x36x256xf32> to vector<36x256xf32>
    %cst = arith.constant dense<0.000000e+00> : vector<8x256xf32>
    %4 = tpu.matmul %0, %3, %cst {dimension_numbers = #tpu.dot_dimension_numbers<[1], [0], [0], [1], [0, 0, 1, 1], [], []>} : vector<8x36xf32>, vector<36x256xf32>, vector<8x256xf32> -> vector<8x256xf32>
    %5 = vector.broadcast %1 : vector<8x1xf32> to vector<8x256xf32>
    %6 = arith.addf %4, %5 : vector<8x256xf32>
    %cst_6 = arith.constant 0.000000e+00 : f32
    %7 = vector.broadcast %cst_6 : f32 to vector<8x256xf32>
    %8 = arith.maximumf %6, %7 : vector<8x256xf32>
    %c0_7 = arith.constant 0 : index
    %c0_8 = arith.constant 0 : index
    %c0_9 = arith.constant 0 : index
    %9 = vector.load %arg3[%c0_7, %c0_8, %c0_9] : memref<2x8x256xf32, #tpu.memory_space<vmem>>, vector<1x8x256xf32>
    %10 = vector.shape_cast %9 : vector<1x8x256xf32> to vector<8x256xf32>
    %11 = vector.shape_cast %8 : vector<8x256xf32> to vector<1x8x256xf32>
    tpu.vector_store %arg3[%c0_7, %c0_8, %c0_9], %11 {strides = array<i32>} : memref<2x8x256xf32, #tpu.memory_space<vmem>>, vector<1x8x256xf32>,
    %c1 = arith.constant 1 : index
    %c0_10 = arith.constant 0 : index
    %c0_11 = arith.constant 0 : index
    %12 = vector.load %arg0[%c1, %c0_10, %c0_11] : memref<2x36x256xf32, #tpu.memory_space<vmem>>, vector<1x36x256xf32>
    %13 = vector.shape_cast %12 : vector<1x36x256xf32> to vector<36x256xf32>
    %cst_12 = arith.constant dense<0.000000e+00> : vector<8x256xf32>
    %14 = tpu.matmul %0, %13, %cst_12 {dimension_numbers = #tpu.dot_dimension_numbers<[1], [0], [0], [1], [0, 0, 1, 1], [], []>} : vector<8x36xf32>, vector<36x256xf32>, vector<8x256xf32> -> vector<8x256xf32>
    %15 = vector.broadcast %1 : vector<8x1xf32> to vector<8x256xf32>
    %16 = arith.addf %14, %15 : vector<8x256xf32>
    %cst_13 = arith.constant 0.000000e+00 : f32
    %17 = vector.broadcast %cst_13 : f32 to vector<8x256xf32>
    %18 = arith.maximumf %16, %17 : vector<8x256xf32>
    %c1_14 = arith.constant 1 : index
    %c0_15 = arith.constant 0 : index
    %c0_16 = arith.constant 0 : index
    %19 = vector.load %arg3[%c1_14, %c0_15, %c0_16] : memref<2x8x256xf32, #tpu.memory_space<vmem>>, vector<1x8x256xf32>
    %20 = vector.shape_cast %19 : vector<1x8x256xf32> to vector<8x256xf32>
    %21 = vector.shape_cast %18 : vector<8x256xf32> to vector<1x8x256xf32>
    tpu.vector_store %arg3[%c1_14, %c0_15, %c0_16], %21 {strides = array<i32>} : memref<2x8x256xf32, #tpu.memory_space<vmem>>, vector<1x8x256xf32>,
    return
  }
}

</mosaic_0001>

<llo_original>
// kernel: tpu_custom_call.1
$region0: #{tpu_custom_call.1}
  #allocation0 [shape = 'u32[]', space=smem, size = 0x4, offset = 0x4, fixed_abs, tag = 'smem constant byte address 0x4 - core index']
  #allocation1 [shape = 'u32[144,128]{1,0:T(1,128)}', space=vmem, size = 0x12000, scoped, tag = 'internal scratch']
  %s0 = inlined_call_operand.vmem [shape: f32[2,36,256], index: 0, kind: input, shape index: {}]
  %s1 = inlined_call_operand.vmem [shape: f32[8,36], index: 1, kind: input, shape index: {}]
  %s2 = inlined_call_operand.vmem [shape: f32[8,1], index: 2, kind: input, shape index: {}]
  %s3 = inlined_call_operand.hbm [shape: f32[2,8,256], index: 3, kind: output, shape index: {}]
  %s4 = sld [smem:[#allocation0]]
  $region22: #{tpu_custom_call.1} parent=0
    _
  %s6 = ssub.s32 1, %s4
  %s7 = scalar_select 0, %s6, %s4
  $region1: #{tpu_custom_call.1} parent=0
    #allocation2 [shape = 'u8[16384]{0}', space=vmem, size = 0x4000, scoped, tag = 'output window, operand 0, single buffered']
    #allocation3 [shape = 's32[1]{0}', space=sflag, size = 0x4, scoped, tag = 'scoped memory for tpu_custom_call.1']
    %8 = vsyncpa [#allocation3], 0
    // Predicated region
    $region2: #{tpu_custom_call.1} parent=1 // pred_check
      _
    $region3: #{tpu_custom_call.1} parent=1 // pred_check_branch
      %10 = sbr.rel (0) target = $region5
    $region4: #{tpu_custom_call.1} parent=1 // pred_region
      _
    $region5: #{tpu_custom_call.1} parent=1 // pred_fallthru
      _
    // Predicated region
    $region6: #{tpu_custom_call.1} parent=1 // pred_check
      _
    $region7: #{tpu_custom_call.1} parent=1 // pred_check_branch
      %12 = sbr.rel (0) target = $region9
    $region8: #{tpu_custom_call.1} parent=1 // pred_region
      _
    $region9: #{tpu_custom_call.1} parent=1 // pred_fallthru
      _
    // Predicated region
    $region10: #{tpu_custom_call.1} parent=1 // pred_check
      _
    $region11: #{tpu_custom_call.1} parent=1 // pred_check_branch
      %14 = sbr.rel (0) target = $region13
    $region12: #{tpu_custom_call.1} parent=1 // pred_region
      _
    $region13: #{tpu_custom_call.1} parent=1 // pred_fallthru
      _
    %v15 = vld [vmem:[%s1] sm:$0xff]
    %v16 = vld [vmem:[%s2] sm:$0xff]
    %v17 = vld [vmem:[%s0] sm:$0xff]
    %v18 = vld [vmem:[%s0 + $0x8] sm:$0xff]
    %v19 = vld [vmem:[%s0 + $0x10] sm:$0xff]
    %v20 = vld [vmem:[%s0 + $0x18] sm:$0xff]
    %v21 = vld [vmem:[%s0 + $0x20] sm:$0xff]
    %v22 = vld [vmem:[%s0 + $0x28] sm:$0xff]
    %v23 = vld [vmem:[%s0 + $0x30] sm:$0xff]
    %v24 = vld [vmem:[%s0 + $0x38] sm:$0xff]
    %v25 = vld [vmem:[%s0 + $0x40] sm:$0xf]
    %v26 = vld [vmem:[%s0 + $0x48] sm:$0xf]
    %28 = vset.pattern.permute.xlu0 0
    %29 = vperm.xlu0 %28, %v16
    %v30 = vpop.permute.xlu0 %29
    %vm32 = vcmask 293888
    %v34 = vsel %vm32, %v15, 0
    %vm36 = vcmask 1043456
    %v38 = vsel %vm36, %v25, 0
    %v41 = vsel %vm36, %v26, 0
    %43 = vmatprep.subr.mxu0 %v18
    %44 = vmatpush1.msra.mxu0 %v17
    %45 = vmatprep.subr.mxu0 %v20
    %46 = vmatpush1.msra.mxu0 %v19
    %47 = vmatprep.subr.mxu0 %v22
    %48 = vmatpush1.msra.mxu0 %v21
    %49 = vmatprep.subr.mxu0 %v24
    %50 = vmatpush1.msra.mxu0 %v23
    %51 = vmatprep.subr.mxu0 %v41
    %52 = vmatpush1.msra.mxu0 %v38
    %53 = vmatprep.subr.mxu0 0.0
    %54 = vmatpush1.msra.mxu0 0.0
    %55 = vmatprep.subr.mxu0 0.0
    %56 = vmatpush1.msra.mxu0 0.0
    %57 = vmatprep.subr.mxu0 0.0
    %58 = vmatpush1.msra.mxu0 0.0
    %59 = vmatprep.subr.mxu0 0.0
    %60 = vmatpush1.msra.mxu0 0.0
    %61 = vmatprep.subr.mxu0 0.0
    %62 = vmatpush1.msra.mxu0 0.0
    %63 = vmatprep.subr.mxu0 0.0
    %64 = vmatpush1.msra.mxu0 0.0
    %65 = vmatprep.subr.mxu0 0.0
    %66 = vmatpush1.msra.mxu0 0.0
    %67 = vmatprep.subr.mxu0 0.0
    %68 = vmatpush1.msra.mxu0 0.0
    %69 = vmatprep.subr.mxu0 0.0
    %70 = vmatpush1.msra.mxu0 0.0
    %71 = vmatprep.subr.mxu0 0.0
    %72 = vmatpush1.msra.mxu0 0.0
    %73 = vmatprep.subr.mxu0 0.0
    %74 = vmatpush1.msra.mxu0 0.0
    %75 = vmatprep.subr.mxu0 0.0
    %76 = vmatpush1.msra.mxu0 0.0
    %77 = vmatprep.subr.mxu0 0.0
    %78 = vmatpush1.msra.mxu0 0.0
    %79 = vmatprep.subr.mxu0 0.0
    %80 = vmatpush1.msra.mxu0 0.0
    %81 = vmatprep.subr.mxu0 0.0
    %82 = vmatpush1.msra.mxu0 0.0
    %83 = vmatprep.subr.mxu0 0.0
    %84 = vmatpush1.msra.mxu0 0.0
    %85 = vmatprep.subr.mxu0 0.0
    %86 = vmatpush1.msra.mxu0 0.0
    %87 = vmatprep.subr.mxu0 0.0
    %88 = vmatpush1.msra.mxu0 0.0
    %89 = vmatprep.subr.mxu0 0.0
    %90 = vmatpush1.msra.mxu0 0.0
    %91 = vmatprep.subr.mxu0 0.0
    %92 = vmatpush1.msra.mxu0 0.0
    %93 = vmatprep.subr.mxu0 0.0
    %94 = vmatpush1.msra.mxu0 0.0
    %95 = vmatprep.subr.mxu0 0.0
    %96 = vmatpush1.msra.mxu0 0.0
    %97 = vmatprep.subr.mxu0 0.0
    %98 = vmatpush1.msra.mxu0 0.0
    %99 = vmatprep.subr.mxu0 0.0
    %100 = vmatpush1.msra.mxu0 0.0
    %101 = vmatprep.subr.mxu0 0.0
    %102 = vmatpush1.msra.mxu0 0.0
    %103 = vmatprep.subr.mxu0 0.0
    %104 = vmatpush1.msra.mxu0 0.0
    %105 = vmatprep.subr.mxu0 0.0
    %106 = vmatpush1.msra.mxu0 0.0
    %107 = vmatprep.mubr.f32.mxu0 0.0
    %108 = vmatmul.mubr.f32.gmra.mrb[0].mxu0 %v34
    %v109 = vpop.f32.mrb[0].mxu0
    %v110 = vadd.f32 %v30, %v109
    %v111 = vpop.f32.mrb[0].mxu0
    %v112 = vadd.f32 %v30, %v111
    %113 = vdwg.mxu0
    %v114 = vmax.f32 %v110, 0.0
    %v115 = vmax.f32 %v112, 0.0
    %116 = vst [vmem:[#allocation2] sm:$0xff] %v114
    %117 = vst [vmem:[#allocation2 + $0x8] sm:$0xff] %v115
    %s118 = scalar_lea.vmem %s0, 80
    %v119 = vld [vmem:[%s118] sm:$0xff]
    %v120 = vld [vmem:[%s118 + $0x8] sm:$0xff]
    %v121 = vld [vmem:[%s118 + $0x10] sm:$0xff]
    %v122 = vld [vmem:[%s118 + $0x18] sm:$0xff]
    %v123 = vld [vmem:[%s118 + $0x20] sm:$0xff]
    %v124 = vld [vmem:[%s118 + $0x28] sm:$0xff]
    %v125 = vld [vmem:[%s118 + $0x30] sm:$0xff]
    %v126 = vld [vmem:[%s118 + $0x38] sm:$0xff]
    %v127 = vld [vmem:[%s118 + $0x40] sm:$0xf]
    %v128 = vld [vmem:[%s118 + $0x48] sm:$0xf]
    %v130 = vsel %vm36, %v127, 0
    %v133 = vsel %vm36, %v128, 0
    %135 = vmatprep.subr.mxu0 %v120
    %136 = vmatpush1.msra.mxu0 %v119
    %137 = vmatprep.subr.mxu0 %v122
    %138 = vmatpush1.msra.mxu0 %v121
    %139 = vmatprep.subr.mxu0 %v124
    %140 = vmatpush1.msra.mxu0 %v123
    %141 = vmatprep.subr.mxu0 %v126
    %142 = vmatpush1.msra.mxu0 %v125
    %143 = vmatprep.subr.mxu0 %v133
    %144 = vmatpush1.msra.mxu0 %v130
    %145 = vmatprep.subr.mxu0 0.0
    %146 = vmatpush1.msra.mxu0 0.0
    %147 = vmatprep.subr.mxu0 0.0
    %148 = vmatpush1.msra.mxu0 0.0
    %149 = vmatprep.subr.mxu0 0.0
    %150 = vmatpush1.msra.mxu0 0.0
    %151 = vmatprep.subr.mxu0 0.0
    %152 = vmatpush1.msra.mxu0 0.0
    %153 = vmatprep.subr.mxu0 0.0
    %154 = vmatpush1.msra.mxu0 0.0
    %155 = vmatprep.subr.mxu0 0.0
    %156 = vmatpush1.msra.mxu0 0.0
    %157 = vmatprep.subr.mxu0 0.0
    %158 = vmatpush1.msra.mxu0 0.0
    %159 = vmatprep.subr.mxu0 0.0
    %160 = vmatpush1.msra.mxu0 0.0
    %161 = vmatprep.subr.mxu0 0.0
    %162 = vmatpush1.msra.mxu0 0.0
    %163 = vmatprep.subr.mxu0 0.0
    %164 = vmatpush1.msra.mxu0 0.0
    %165 = vmatprep.subr.mxu0 0.0
    %166 = vmatpush1.msra.mxu0 0.0
    %167 = vmatprep.subr.mxu0 0.0
    %168 = vmatpush1.msra.mxu0 0.0
    %169 = vmatprep.subr.mxu0 0.0
    %170 = vmatpush1.msra.mxu0 0.0
    %171 = vmatprep.subr.mxu0 0.0
    %172 = vmatpush1.msra.mxu0 0.0
    %173 = vmatprep.subr.mxu0 0.0
    %174 = vmatpush1.msra.mxu0 0.0
    %175 = vmatprep.subr.mxu0 0.0
    %176 = vmatpush1.msra.mxu0 0.0
    %177 = vmatprep.subr.mxu0 0.0
    %178 = vmatpush1.msra.mxu0 0.0
    %179 = vmatprep.subr.mxu0 0.0
    %180 = vmatpush1.msra.mxu0 0.0
    %181 = vmatprep.subr.mxu0 0.0
    %182 = vmatpush1.msra.mxu0 0.0
    %183 = vmatprep.subr.mxu0 0.0
    %184 = vmatpush1.msra.mxu0 0.0
    %185 = vmatprep.subr.mxu0 0.0
    %186 = vmatpush1.msra.mxu0 0.0
    %187 = vmatprep.subr.mxu0 0.0
    %188 = vmatpush1.msra.mxu0 0.0
    %189 = vmatprep.subr.mxu0 0.0
    %190 = vmatpush1.msra.mxu0 0.0
    %191 = vmatprep.subr.mxu0 0.0
    %192 = vmatpush1.msra.mxu0 0.0
    %193 = vmatprep.subr.mxu0 0.0
    %194 = vmatpush1.msra.mxu0 0.0
    %195 = vmatprep.subr.mxu0 0.0
    %196 = vmatpush1.msra.mxu0 0.0
    %197 = vmatprep.subr.mxu0 0.0
    %198 = vmatpush1.msra.mxu0 0.0
    %199 = vmatprep.mubr.f32.mxu0 0.0
    %200 = vmatmul.mubr.f32.gmra.mrb[0].mxu0 %v34
    %v201 = vpop.f32.mrb[0].mxu0
    %v202 = vadd.f32 %v30, %v201
    %v203 = vpop.f32.mrb[0].mxu0
    %v204 = vadd.f32 %v30, %v203
    %205 = vdwg.mxu0
    %v206 = vmax.f32 %v202, 0.0
    %v207 = vmax.f32 %v204, 0.0
    %s208 = scalar_lea.vmem [#allocation2], 16
    %209 = vst [vmem:[%s208] sm:$0xff] %v206
    %210 = vst [vmem:[%s208 + $0x8] sm:$0xff] %v207
    // Predicated region
    $region14: #{tpu_custom_call.1} parent=1 // pred_check
      _
    $region15: #{tpu_custom_call.1} parent=1 // pred_check_branch
      %212 = sbr.rel (0) target = $region17
    $region16: #{tpu_custom_call.1} parent=1 // pred_region
      %s214 = ssub.s32 512, 512
      %215 = vsyncadd [#allocation3], %s214
      %s216 = sshll.u32 [#allocation2], 4
      %s217 = int_to_ptr.vmem [resolvable:$true] %s216
      %222 = dma.vmem_to_hbm [thread:$0]  %s217, 512, %s3, [#allocation3], 256, 256, 16
    $region17: #{tpu_custom_call.1} parent=1 // pred_fallthru
      _
    // Predicated region
    $region18: #{tpu_custom_call.1} parent=1 // pred_check
      _
    $region19: #{tpu_custom_call.1} parent=1 // pred_check_branch
      %224 = sbr.rel (0) target = $region21
    $region20: #{tpu_custom_call.1} parent=1 // pred_region
      %225 = dma.done [#allocation3], 512
    $region21: #{tpu_custom_call.1} parent=1 // pred_fallthru
      _
    %226 = vsyncpa [#allocation3], 1

</llo_original>
